<compile_context>
chip_gen: v5e
topology: v5e:2x2
jax: 0.10.0
libtpu: 0.0.40
codegen_flags: <defaults>
</compile_context>

<pallas_src>
import jax
import jax.numpy as jnp
from jax.experimental import pallas as pl
from jax.experimental.pallas import tpu as pltpu


def encoder_gru_kernel(src_ref, proj_ref, whh_ref, bhn_ref, h_out_ref, gi_ref):
    """Fused Embedding + input-projection + GRU recurrence (final hidden only).

    src_ref : (S*B, 1)  int32  flattened token ids (time-major)
    proj_ref: (V, 3H)   f32    emb_table @ W_ih^T with r/z/n input-side biases folded in
    whh_ref : (H, 3H)   f32    W_hh^T, gate columns ordered [r | z | n]
    bhn_ref : (1, H)    f32    hidden bias of the n gate (must stay inside r*(...))
    h_out   : (B, H)    f32    final GRU hidden state
    gi_ref  : (S*B, 3H) f32    VMEM scratch holding the hoisted input projection
    """
    SB = src_ref.shape[0]
    V = proj_ref.shape[0]
    B, H = h_out_ref.shape
    S = SB // B
    H2 = 2 * H

    # --- Prologue: fused embedding + input projection + bias, one MXU matmul.
    # One-hot matmul is exact for 0/1 weights; dropout is identity in eval mode.
    idx = src_ref[...]                                          # (S*B, 1) int32
    iota_v = jax.lax.broadcasted_iota(jnp.int32, (SB, V), 1)    # (S*B, V)
    onehot = jnp.where(idx == iota_v, 1.0, 0.0).astype(jnp.float32)
    gi_ref[...] = jnp.dot(onehot, proj_ref[...],
                          preferred_element_type=jnp.float32)   # (S*B, 3H)

    whh = whh_ref[...]                                          # (H, 3H), held across steps
    b_hn = jnp.broadcast_to(bhn_ref[...], (B, H))               # hoisted out of the loop

    # --- Recurrence: fully unrolled (S small and static); h is the loop carry.
    h = jnp.zeros((B, H), jnp.float32)
    for t in range(S):
        lo = t * B                                              # static, sublane-aligned
        gi = gi_ref[lo:lo + B, :]                               # (B, 3H) per-step VMEM load
        gh = jnp.dot(h, whh, preferred_element_type=jnp.float32)  # ONE 96-wide MXU op
        rz = jax.nn.sigmoid(gi[:, :H2] + gh[:, :H2])            # ONE EUP call for r and z
        r = rz[:, :H]
        z = rz[:, H:H2]
        n = jnp.tanh(gi[:, H2:] + r * (gh[:, H2:] + b_hn))
        h = (1.0 - z) * n + z * h

    h_out_ref[...] = h.astype(h_out_ref.dtype)


def encoder_forward(src, emb_table, w_ih, w_hh, b_ih, b_hh):
    """Pallas implementation of Encoder.forward (eval mode).

    src       : (S, B) int32
    emb_table : (V, E) f32
    w_ih      : (3H, E) f32   (PyTorch weight_ih_l0, gate order r, z, n)
    w_hh      : (3H, H) f32   (PyTorch weight_hh_l0)
    b_ih,b_hh : (3H,)   f32
    returns   : (1, B, H) f32 (PyTorch `hidden`)
    """
    S, B = src.shape
    V, E = emb_table.shape
    H = w_hh.shape[1]

    # Weight-only precompute (amortized / constant-folded under jit):
    #   proj[v, :] = emb_table[v] @ W_ih^T + [b_ir+b_hr | b_iz+b_hz | b_in]
    # Folding the biases into proj rows is valid because each one-hot row sums to 1.
    bias_fold = jnp.concatenate([b_ih[:2 * H] + b_hh[:2 * H], b_ih[2 * H:]])   # (3H,)
    proj = emb_table @ w_ih.T + bias_fold[None, :]                             # (V, 3H)
    whh = w_hh.T                                                               # (H, 3H)
    b_hn = b_hh[2 * H:].reshape(1, H)                                          # (1, H)

    src2d = src.reshape(S * B, 1).astype(jnp.int32)

    vmem = pl.BlockSpec(memory_space=pltpu.MemorySpace.VMEM)   # whole array in VMEM
    hidden = pl.pallas_call(
        encoder_gru_kernel,
        out_shape=jax.ShapeDtypeStruct((B, H), jnp.float32),
        in_specs=[vmem, vmem, vmem, vmem],
        out_specs=vmem,
        scratch_shapes=[pltpu.VMEM((S * B, 3 * H), jnp.float32)],
    )(src2d,
      proj.astype(jnp.float32),
      whh.astype(jnp.float32),
      b_hn.astype(jnp.float32))

    return hidden[None]                                        # (1, B, H)


def reference_forward(src, emb_table, w_ih, w_hh, b_ih, b_hh):
    """Pure-JAX reference implementing PyTorch GRU semantics (for verification)."""
    embedded = jnp.take(emb_table, src, axis=0)                # (S, B, E)
    H = w_hh.shape[1]
    h0 = jnp.zeros((src.shape[1], H), jnp.float32)

    def step(h, x_t):
        gi = x_t @ w_ih.T + b_ih
        gh = h @ w_hh.T + b_hh
        i_r, i_z, i_n = gi[:, :H], gi[:, H:2 * H], gi[:, 2 * H:]
        h_r, h_z, h_n = gh[:, :H], gh[:, H:2 * H], gh[:, 2 * H:]
        r = jax.nn.sigmoid(i_r + h_r)
        z = jax.nn.sigmoid(i_z + h_z)
        n = jnp.tanh(i_n + r * h_n)
        h_new = (1.0 - z) * n + z * h
        return h_new, None

    h_final, _ = jax.lax.scan(step, h0, embedded)
    return h_final[None]


if __name__ == "__main__":
    # Small shapes consistent with the module: vocab=50, emb=32, hid=32, seq=8, batch=8.
    INPUT_DIM, EMB_DIM, HID_DIM = 50, 32, 32
    SEQ_LEN, BATCH = 8, 8

    key = jax.random.PRNGKey(0)
    k_emb, k_wih, k_whh, k_bih, k_bhh, k_src = jax.random.split(key, 6)

    # Deterministic parameter init (PyTorch-style: Embedding ~ N(0,1),
    # GRU params ~ U(-1/sqrt(H), 1/sqrt(H))).
    bound = 1.0 / (HID_DIM ** 0.5)
    emb_table = jax.random.normal(k_emb, (INPUT_DIM, EMB_DIM), jnp.float32)
    w_ih = jax.random.uniform(k_wih, (3 * HID_DIM, EMB_DIM), jnp.float32, -bound, bound)
    w_hh = jax.random.uniform(k_whh, (3 * HID_DIM, HID_DIM), jnp.float32, -bound, bound)
    b_ih = jax.random.uniform(k_bih, (3 * HID_DIM,), jnp.float32, -bound, bound)
    b_hh = jax.random.uniform(k_bhh, (3 * HID_DIM,), jnp.float32, -bound, bound)

    src = jax.random.randint(k_src, (SEQ_LEN, BATCH), 0, INPUT_DIM, jnp.int32)

    # TODO(synk): training-mode dropout (stochastic masking of embeddings) is not
    # implemented; eval-mode dropout is the identity, which is what is computed here.
    # (The emb@W_ih fold in the wrapper is only valid on this eval path.)
    hidden = encoder_forward(src, emb_table, w_ih, w_hh, b_ih, b_hh)
    hidden = jax.block_until_ready(hidden)

    ref = reference_forward(src, emb_table, w_ih, w_hh, b_ih, b_hh)
    assert hidden.shape == (1, BATCH, HID_DIM)
    assert jnp.allclose(hidden, ref, atol=2e-3, rtol=2e-3), (
        float(jnp.max(jnp.abs(hidden - ref))))

    print("KERNEL_OK")
</pallas_src>

<mosaic_0001>
module attributes {stable_mosaic.version = 11 : i64} {
  func.func @encoder_gru_kernel(%arg0: memref<64x1xi32, #tpu.memory_space<vmem>>, %arg1: memref<50x96xf32, #tpu.memory_space<vmem>>, %arg2: memref<32x96xf32, #tpu.memory_space<vmem>>, %arg3: memref<1x32xf32, #tpu.memory_space<vmem>>, %arg4: memref<8x32xf32, #tpu.memory_space<vmem>>, %arg5: memref<64x96xf32, #tpu.memory_space<vmem>>) attributes {dimension_semantics = [], scalar_prefetch = 0 : i64, scratch_operands = 1 : i64, tpu.core_type = #tpu.core_type<tc>} {
    %c0 = arith.constant 0 : index
    %c0_0 = arith.constant 0 : index
    %0 = vector.load %arg0[%c0, %c0_0] : memref<64x1xi32, #tpu.memory_space<vmem>>, vector<64x1xi32>
    %1 = tpu.iota {dimensions = array<i32: 1>} : vector<64x50xi32>
    %2 = vector.broadcast %0 : vector<64x1xi32> to vector<64x50xi32>
    %3 = arith.cmpi eq, %2, %1 : vector<64x50xi32>
    %cst = arith.constant 1.000000e+00 : f32
    %cst_1 = arith.constant 0.000000e+00 : f32
    %4 = vector.broadcast %cst : f32 to vector<64x50xf32>
    %5 = vector.broadcast %cst_1 : f32 to vector<64x50xf32>
    %6 = arith.select %3, %4, %5 : vector<64x50xi1>, vector<64x50xf32>
    %c0_2 = arith.constant 0 : index
    %c0_3 = arith.constant 0 : index
    %7 = vector.load %arg1[%c0_2, %c0_3] : memref<50x96xf32, #tpu.memory_space<vmem>>, vector<50x96xf32>
    %cst_4 = arith.constant dense<0.000000e+00> : vector<64x96xf32>
    %8 = tpu.matmul %6, %7, %cst_4 {dimension_numbers = #tpu.dot_dimension_numbers<[1], [0], [0], [1], [0, 0, 1, 1], [], []>} : vector<64x50xf32>, vector<50x96xf32>, vector<64x96xf32> -> vector<64x96xf32>
    %c0_5 = arith.constant 0 : index
    %c0_6 = arith.constant 0 : index
    %9 = vector.load %arg5[%c0_5, %c0_6] : memref<64x96xf32, #tpu.memory_space<vmem>>, vector<64x96xf32>
    tpu.vector_store %arg5[%c0_5, %c0_6], %8 {strides = array<i32>} : memref<64x96xf32, #tpu.memory_space<vmem>>, vector<64x96xf32>,
    %c0_7 = arith.constant 0 : index
    %c0_8 = arith.constant 0 : index
    %10 = vector.load %arg2[%c0_7, %c0_8] : memref<32x96xf32, #tpu.memory_space<vmem>>, vector<32x96xf32>
    %c0_9 = arith.constant 0 : index
    %c0_10 = arith.constant 0 : index
    %11 = vector.load %arg3[%c0_9, %c0_10] : memref<1x32xf32, #tpu.memory_space<vmem>>, vector<1x32xf32>
    %12 = vector.shape_cast %11 : vector<1x32xf32> to vector<1x32xf32>
    %13 = vector.broadcast %12 : vector<1x32xf32> to vector<8x32xf32>
    %cst_11 = arith.constant 0.000000e+00 : f32
    %14 = vector.broadcast %cst_11 : f32 to vector<8x32xf32>
    %c0_12 = arith.constant 0 : index
    %c0_13 = arith.constant 0 : index
    %15 = vector.load %arg5[%c0_12, %c0_13] : memref<64x96xf32, #tpu.memory_space<vmem>>, vector<8x96xf32>
    %cst_14 = arith.constant dense<0.000000e+00> : vector<8x96xf32>
    %16 = tpu.matmul %14, %10, %cst_14 {dimension_numbers = #tpu.dot_dimension_numbers<[1], [0], [0], [1], [0, 0, 1, 1], [], []>} : vector<8x32xf32>, vector<32x96xf32>, vector<8x96xf32> -> vector<8x96xf32>
    %17 = vector.extract_strided_slice %15 {offsets = [0, 0], sizes = [8, 64], strides = [1, 1]} : vector<8x96xf32> to vector<8x64xf32>
    %18 = vector.extract_strided_slice %16 {offsets = [0, 0], sizes = [8, 64], strides = [1, 1]} : vector<8x96xf32> to vector<8x64xf32>
    %19 = arith.addf %17, %18 : vector<8x64xf32>
    %20 = arith.negf %19 : vector<8x64xf32>
    %21 = math.exp %20 : vector<8x64xf32>
    %cst_15 = arith.constant 1.000000e+00 : f32
    %22 = vector.broadcast %cst_15 : f32 to vector<8x64xf32>
    %23 = arith.addf %22, %21 : vector<8x64xf32>
    %24 = arith.divf %22, %23 : vector<8x64xf32>
    %25 = vector.extract_strided_slice %24 {offsets = [0, 0], sizes = [8, 32], strides = [1, 1]} : vector<8x64xf32> to vector<8x32xf32>
    %26 = vector.extract_strided_slice %24 {offsets = [0, 32], sizes = [8, 32], strides = [1, 1]} : vector<8x64xf32> to vector<8x32xf32>
    %27 = vector.extract_strided_slice %15 {offsets = [0, 64], sizes = [8, 32], strides = [1, 1]} : vector<8x96xf32> to vector<8x32xf32>
    %28 = vector.extract_strided_slice %16 {offsets = [0, 64], sizes = [8, 32], strides = [1, 1]} : vector<8x96xf32> to vector<8x32xf32>
    %29 = arith.addf %28, %13 : vector<8x32xf32>
    %30 = arith.mulf %25, %29 : vector<8x32xf32>
    %31 = arith.addf %27, %30 : vector<8x32xf32>
    %32 = math.tanh %31 : vector<8x32xf32>
    %cst_16 = arith.constant 1.000000e+00 : f32
    %33 = vector.broadcast %cst_16 : f32 to vector<8x32xf32>
    %34 = arith.subf %33, %26 : vector<8x32xf32>
    %35 = arith.mulf %34, %32 : vector<8x32xf32>
    %36 = arith.mulf %26, %14 : vector<8x32xf32>
    %37 = arith.addf %35, %36 : vector<8x32xf32>
    %c8 = arith.constant 8 : index
    %c0_17 = arith.constant 0 : index
    %38 = vector.load %arg5[%c8, %c0_17] : memref<64x96xf32, #tpu.memory_space<vmem>>, vector<8x96xf32>
    %cst_18 = arith.constant dense<0.000000e+00> : vector<8x96xf32>
    %39 = tpu.matmul %37, %10, %cst_18 {dimension_numbers = #tpu.dot_dimension_numbers<[1], [0], [0], [1], [0, 0, 1, 1], [], []>} : vector<8x32xf32>, vector<32x96xf32>, vector<8x96xf32> -> vector<8x96xf32>
    %40 = vector.extract_strided_slice %38 {offsets = [0, 0], sizes = [8, 64], strides = [1, 1]} : vector<8x96xf32> to vector<8x64xf32>
    %41 = vector.extract_strided_slice %39 {offsets = [0, 0], sizes = [8, 64], strides = [1, 1]} : vector<8x96xf32> to vector<8x64xf32>
    %42 = arith.addf %40, %41 : vector<8x64xf32>
    %43 = arith.negf %42 : vector<8x64xf32>
    %44 = math.exp %43 : vector<8x64xf32>
    %cst_19 = arith.constant 1.000000e+00 : f32
    %45 = vector.broadcast %cst_19 : f32 to vector<8x64xf32>
    %46 = arith.addf %45, %44 : vector<8x64xf32>
    %47 = arith.divf %45, %46 : vector<8x64xf32>
    %48 = vector.extract_strided_slice %47 {offsets = [0, 0], sizes = [8, 32], strides = [1, 1]} : vector<8x64xf32> to vector<8x32xf32>
    %49 = vector.extract_strided_slice %47 {offsets = [0, 32], sizes = [8, 32], strides = [1, 1]} : vector<8x64xf32> to vector<8x32xf32>
    %50 = vector.extract_strided_slice %38 {offsets = [0, 64], sizes = [8, 32], strides = [1, 1]} : vector<8x96xf32> to vector<8x32xf32>
    %51 = vector.extract_strided_slice %39 {offsets = [0, 64], sizes = [8, 32], strides = [1, 1]} : vector<8x96xf32> to vector<8x32xf32>
    %52 = arith.addf %51, %13 : vector<8x32xf32>
    %53 = arith.mulf %48, %52 : vector<8x32xf32>
    %54 = arith.addf %50, %53 : vector<8x32xf32>
    %55 = math.tanh %54 : vector<8x32xf32>
    %cst_20 = arith.constant 1.000000e+00 : f32
    %56 = vector.broadcast %cst_20 : f32 to vector<8x32xf32>
    %57 = arith.subf %56, %49 : vector<8x32xf32>
    %58 = arith.mulf %57, %55 : vector<8x32xf32>
    %59 = arith.mulf %49, %37 : vector<8x32xf32>
    %60 = arith.addf %58, %59 : vector<8x32xf32>
    %c16 = arith.constant 16 : index
    %c0_21 = arith.constant 0 : index
    %61 = vector.load %arg5[%c16, %c0_21] : memref<64x96xf32, #tpu.memory_space<vmem>>, vector<8x96xf32>
    %cst_22 = arith.constant dense<0.000000e+00> : vector<8x96xf32>
    %62 = tpu.matmul %60, %10, %cst_22 {dimension_numbers = #tpu.dot_dimension_numbers<[1], [0], [0], [1], [0, 0, 1, 1], [], []>} : vector<8x32xf32>, vector<32x96xf32>, vector<8x96xf32> -> vector<8x96xf32>
    %63 = vector.extract_strided_slice %61 {offsets = [0, 0], sizes = [8, 64], strides = [1, 1]} : vector<8x96xf32> to vector<8x64xf32>
    %64 = vector.extract_strided_slice %62 {offsets = [0, 0], sizes = [8, 64], strides = [1, 1]} : vector<8x96xf32> to vector<8x64xf32>
    %65 = arith.addf %63, %64 : vector<8x64xf32>
    %66 = arith.negf %65 : vector<8x64xf32>
    %67 = math.exp %66 : vector<8x64xf32>
    %cst_23 = arith.constant 1.000000e+00 : f32
    %68 = vector.broadcast %cst_23 : f32 to vector<8x64xf32>
    %69 = arith.addf %68, %67 : vector<8x64xf32>
    %70 = arith.divf %68, %69 : vector<8x64xf32>
    %71 = vector.extract_strided_slice %70 {offsets = [0, 0], sizes = [8, 32], strides = [1, 1]} : vector<8x64xf32> to vector<8x32xf32>
    %72 = vector.extract_strided_slice %70 {offsets = [0, 32], sizes = [8, 32], strides = [1, 1]} : vector<8x64xf32> to vector<8x32xf32>
    %73 = vector.extract_strided_slice %61 {offsets = [0, 64], sizes = [8, 32], strides = [1, 1]} : vector<8x96xf32> to vector<8x32xf32>
    %74 = vector.extract_strided_slice %62 {offsets = [0, 64], sizes = [8, 32], strides = [1, 1]} : vector<8x96xf32> to vector<8x32xf32>
    %75 = arith.addf %74, %13 : vector<8x32xf32>
    %76 = arith.mulf %71, %75 : vector<8x32xf32>
    %77 = arith.addf %73, %76 : vector<8x32xf32>
    %78 = math.tanh %77 : vector<8x32xf32>
    %cst_24 = arith.constant 1.000000e+00 : f32
    %79 = vector.broadcast %cst_24 : f32 to vector<8x32xf32>
    %80 = arith.subf %79, %72 : vector<8x32xf32>
    %81 = arith.mulf %80, %78 : vector<8x32xf32>
    %82 = arith.mulf %72, %60 : vector<8x32xf32>
    %83 = arith.addf %81, %82 : vector<8x32xf32>
    %c24 = arith.constant 24 : index
    %c0_25 = arith.constant 0 : index
    %84 = vector.load %arg5[%c24, %c0_25] : memref<64x96xf32, #tpu.memory_space<vmem>>, vector<8x96xf32>
    %cst_26 = arith.constant dense<0.000000e+00> : vector<8x96xf32>
    %85 = tpu.matmul %83, %10, %cst_26 {dimension_numbers = #tpu.dot_dimension_numbers<[1], [0], [0], [1], [0, 0, 1, 1], [], []>} : vector<8x32xf32>, vector<32x96xf32>, vector<8x96xf32> -> vector<8x96xf32>
    %86 = vector.extract_strided_slice %84 {offsets = [0, 0], sizes = [8, 64], strides = [1, 1]} : vector<8x96xf32> to vector<8x64xf32>
    %87 = vector.extract_strided_slice %85 {offsets = [0, 0], sizes = [8, 64], strides = [1, 1]} : vector<8x96xf32> to vector<8x64xf32>
    %88 = arith.addf %86, %87 : vector<8x64xf32>
    %89 = arith.negf %88 : vector<8x64xf32>
    %90 = math.exp %89 : vector<8x64xf32>
    %cst_27 = arith.constant 1.000000e+00 : f32
    %91 = vector.broadcast %cst_27 : f32 to vector<8x64xf32>
    %92 = arith.addf %91, %90 : vector<8x64xf32>
    %93 = arith.divf %91, %92 : vector<8x64xf32>
    %94 = vector.extract_strided_slice %93 {offsets = [0, 0], sizes = [8, 32], strides = [1, 1]} : vector<8x64xf32> to vector<8x32xf32>
    %95 = vector.extract_strided_slice %93 {offsets = [0, 32], sizes = [8, 32], strides = [1, 1]} : vector<8x64xf32> to vector<8x32xf32>
    %96 = vector.extract_strided_slice %84 {offsets = [0, 64], sizes = [8, 32], strides = [1, 1]} : vector<8x96xf32> to vector<8x32xf32>
    %97 = vector.extract_strided_slice %85 {offsets = [0, 64], sizes = [8, 32], strides = [1, 1]} : vector<8x96xf32> to vector<8x32xf32>
    %98 = arith.addf %97, %13 : vector<8x32xf32>
    %99 = arith.mulf %94, %98 : vector<8x32xf32>
    %100 = arith.addf %96, %99 : vector<8x32xf32>
    %101 = math.tanh %100 : vector<8x32xf32>
    %cst_28 = arith.constant 1.000000e+00 : f32
    %102 = vector.broadcast %cst_28 : f32 to vector<8x32xf32>
    %103 = arith.subf %102, %95 : vector<8x32xf32>
    %104 = arith.mulf %103, %101 : vector<8x32xf32>
    %105 = arith.mulf %95, %83 : vector<8x32xf32>
    %106 = arith.addf %104, %105 : vector<8x32xf32>
    %c32 = arith.constant 32 : index
    %c0_29 = arith.constant 0 : index
    %107 = vector.load %arg5[%c32, %c0_29] : memref<64x96xf32, #tpu.memory_space<vmem>>, vector<8x96xf32>
    %cst_30 = arith.constant dense<0.000000e+00> : vector<8x96xf32>
    %108 = tpu.matmul %106, %10, %cst_30 {dimension_numbers = #tpu.dot_dimension_numbers<[1], [0], [0], [1], [0, 0, 1, 1], [], []>} : vector<8x32xf32>, vector<32x96xf32>, vector<8x96xf32> -> vector<8x96xf32>
    %109 = vector.extract_strided_slice %107 {offsets = [0, 0], sizes = [8, 64], strides = [1, 1]} : vector<8x96xf32> to vector<8x64xf32>
    %110 = vector.extract_strided_slice %108 {offsets = [0, 0], sizes = [8, 64], strides = [1, 1]} : vector<8x96xf32> to vector<8x64xf32>
    %111 = arith.addf %109, %110 : vector<8x64xf32>
    %112 = arith.negf %111 : vector<8x64xf32>
    %113 = math.exp %112 : vector<8x64xf32>
    %cst_31 = arith.constant 1.000000e+00 : f32
    %114 = vector.broadcast %cst_31 : f32 to vector<8x64xf32>
    %115 = arith.addf %114, %113 : vector<8x64xf32>
    %116 = arith.divf %114, %115 : vector<8x64xf32>
    %117 = vector.extract_strided_slice %116 {offsets = [0, 0], sizes = [8, 32], strides = [1, 1]} : vector<8x64xf32> to vector<8x32xf32>
    %118 = vector.extract_strided_slice %116 {offsets = [0, 32], sizes = [8, 32], strides = [1, 1]} : vector<8x64xf32> to vector<8x32xf32>
    %119 = vector.extract_strided_slice %107 {offsets = [0, 64], sizes = [8, 32], strides = [1, 1]} : vector<8x96xf32> to vector<8x32xf32>
    %120 = vector.extract_strided_slice %108 {offsets = [0, 64], sizes = [8, 32], strides = [1, 1]} : vector<8x96xf32> to vector<8x32xf32>
    %121 = arith.addf %120, %13 : vector<8x32xf32>
    %122 = arith.mulf %117, %121 : vector<8x32xf32>
    %123 = arith.addf %119, %122 : vector<8x32xf32>
    %124 = math.tanh %123 : vector<8x32xf32>
    %cst_32 = arith.constant 1.000000e+00 : f32
    %125 = vector.broadcast %cst_32 : f32 to vector<8x32xf32>
    %126 = arith.subf %125, %118 : vector<8x32xf32>
    %127 = arith.mulf %126, %124 : vector<8x32xf32>
    %128 = arith.mulf %118, %106 : vector<8x32xf32>
    %129 = arith.addf %127, %128 : vector<8x32xf32>
    %c40 = arith.constant 40 : index
    %c0_33 = arith.constant 0 : index
    %130 = vector.load %arg5[%c40, %c0_33] : memref<64x96xf32, #tpu.memory_space<vmem>>, vector<8x96xf32>
    %cst_34 = arith.constant dense<0.000000e+00> : vector<8x96xf32>
    %131 = tpu.matmul %129, %10, %cst_34 {dimension_numbers = #tpu.dot_dimension_numbers<[1], [0], [0], [1], [0, 0, 1, 1], [], []>} : vector<8x32xf32>, vector<32x96xf32>, vector<8x96xf32> -> vector<8x96xf32>
    %132 = vector.extract_strided_slice %130 {offsets = [0, 0], sizes = [8, 64], strides = [1, 1]} : vector<8x96xf32> to vector<8x64xf32>
    %133 = vector.extract_strided_slice %131 {offsets = [0, 0], sizes = [8, 64], strides = [1, 1]} : vector<8x96xf32> to vector<8x64xf32>
    %134 = arith.addf %132, %133 : vector<8x64xf32>
    %135 = arith.negf %134 : vector<8x64xf32>
    %136 = math.exp %135 : vector<8x64xf32>
    %cst_35 = arith.constant 1.000000e+00 : f32
    %137 = vector.broadcast %cst_35 : f32 to vector<8x64xf32>
    %138 = arith.addf %137, %136 : vector<8x64xf32>
    %139 = arith.divf %137, %138 : vector<8x64xf32>
    %140 = vector.extract_strided_slice %139 {offsets = [0, 0], sizes = [8, 32], strides = [1, 1]} : vector<8x64xf32> to vector<8x32xf32>
    %141 = vector.extract_strided_slice %139 {offsets = [0, 32], sizes = [8, 32], strides = [1, 1]} : vector<8x64xf32> to vector<8x32xf32>
    %142 = vector.extract_strided_slice %130 {offsets = [0, 64], sizes = [8, 32], strides = [1, 1]} : vector<8x96xf32> to vector<8x32xf32>
    %143 = vector.extract_strided_slice %131 {offsets = [0, 64], sizes = [8, 32], strides = [1, 1]} : vector<8x96xf32> to vector<8x32xf32>
    %144 = arith.addf %143, %13 : vector<8x32xf32>
    %145 = arith.mulf %140, %144 : vector<8x32xf32>
    %146 = arith.addf %142, %145 : vector<8x32xf32>
    %147 = math.tanh %146 : vector<8x32xf32>
    %cst_36 = arith.constant 1.000000e+00 : f32
    %148 = vector.broadcast %cst_36 : f32 to vector<8x32xf32>
    %149 = arith.subf %148, %141 : vector<8x32xf32>
    %150 = arith.mulf %149, %147 : vector<8x32xf32>
    %151 = arith.mulf %141, %129 : vector<8x32xf32>
    %152 = arith.addf %150, %151 : vector<8x32xf32>
    %c48 = arith.constant 48 : index
    %c0_37 = arith.constant 0 : index
    %153 = vector.load %arg5[%c48, %c0_37] : memref<64x96xf32, #tpu.memory_space<vmem>>, vector<8x96xf32>
    %cst_38 = arith.constant dense<0.000000e+00> : vector<8x96xf32>
    %154 = tpu.matmul %152, %10, %cst_38 {dimension_numbers = #tpu.dot_dimension_numbers<[1], [0], [0], [1], [0, 0, 1, 1], [], []>} : vector<8x32xf32>, vector<32x96xf32>, vector<8x96xf32> -> vector<8x96xf32>
    %155 = vector.extract_strided_slice %153 {offsets = [0, 0], sizes = [8, 64], strides = [1, 1]} : vector<8x96xf32> to vector<8x64xf32>
    %156 = vector.extract_strided_slice %154 {offsets = [0, 0], sizes = [8, 64], strides = [1, 1]} : vector<8x96xf32> to vector<8x64xf32>
    %157 = arith.addf %155, %156 : vector<8x64xf32>
    %158 = arith.negf %157 : vector<8x64xf32>
    %159 = math.exp %158 : vector<8x64xf32>
    %cst_39 = arith.constant 1.000000e+00 : f32
    %160 = vector.broadcast %cst_39 : f32 to vector<8x64xf32>
    %161 = arith.addf %160, %159 : vector<8x64xf32>
    %162 = arith.divf %160, %161 : vector<8x64xf32>
    %163 = vector.extract_strided_slice %162 {offsets = [0, 0], sizes = [8, 32], strides = [1, 1]} : vector<8x64xf32> to vector<8x32xf32>
    %164 = vector.extract_strided_slice %162 {offsets = [0, 32], sizes = [8, 32], strides = [1, 1]} : vector<8x64xf32> to vector<8x32xf32>
    %165 = vector.extract_strided_slice %153 {offsets = [0, 64], sizes = [8, 32], strides = [1, 1]} : vector<8x96xf32> to vector<8x32xf32>
    %166 = vector.extract_strided_slice %154 {offsets = [0, 64], sizes = [8, 32], strides = [1, 1]} : vector<8x96xf32> to vector<8x32xf32>
    %167 = arith.addf %166, %13 : vector<8x32xf32>
    %168 = arith.mulf %163, %167 : vector<8x32xf32>
    %169 = arith.addf %165, %168 : vector<8x32xf32>
    %170 = math.tanh %169 : vector<8x32xf32>
    %cst_40 = arith.constant 1.000000e+00 : f32
    %171 = vector.broadcast %cst_40 : f32 to vector<8x32xf32>
    %172 = arith.subf %171, %164 : vector<8x32xf32>
    %173 = arith.mulf %172, %170 : vector<8x32xf32>
    %174 = arith.mulf %164, %152 : vector<8x32xf32>
    %175 = arith.addf %173, %174 : vector<8x32xf32>
    %c56 = arith.constant 56 : index
    %c0_41 = arith.constant 0 : index
    %176 = vector.load %arg5[%c56, %c0_41] : memref<64x96xf32, #tpu.memory_space<vmem>>, vector<8x96xf32>
    %cst_42 = arith.constant dense<0.000000e+00> : vector<8x96xf32>
    %177 = tpu.matmul %175, %10, %cst_42 {dimension_numbers = #tpu.dot_dimension_numbers<[1], [0], [0], [1], [0, 0, 1, 1], [], []>} : vector<8x32xf32>, vector<32x96xf32>, vector<8x96xf32> -> vector<8x96xf32>
    %178 = vector.extract_strided_slice %176 {offsets = [0, 0], sizes = [8, 64], strides = [1, 1]} : vector<8x96xf32> to vector<8x64xf32>
    %179 = vector.extract_strided_slice %177 {offsets = [0, 0], sizes = [8, 64], strides = [1, 1]} : vector<8x96xf32> to vector<8x64xf32>
    %180 = arith.addf %178, %179 : vector<8x64xf32>
    %181 = arith.negf %180 : vector<8x64xf32>
    %182 = math.exp %181 : vector<8x64xf32>
    %cst_43 = arith.constant 1.000000e+00 : f32
    %183 = vector.broadcast %cst_43 : f32 to vector<8x64xf32>
    %184 = arith.addf %183, %182 : vector<8x64xf32>
    %185 = arith.divf %183, %184 : vector<8x64xf32>
    %186 = vector.extract_strided_slice %185 {offsets = [0, 0], sizes = [8, 32], strides = [1, 1]} : vector<8x64xf32> to vector<8x32xf32>
    %187 = vector.extract_strided_slice %185 {offsets = [0, 32], sizes = [8, 32], strides = [1, 1]} : vector<8x64xf32> to vector<8x32xf32>
    %188 = vector.extract_strided_slice %176 {offsets = [0, 64], sizes = [8, 32], strides = [1, 1]} : vector<8x96xf32> to vector<8x32xf32>
    %189 = vector.extract_strided_slice %177 {offsets = [0, 64], sizes = [8, 32], strides = [1, 1]} : vector<8x96xf32> to vector<8x32xf32>
    %190 = arith.addf %189, %13 : vector<8x32xf32>
    %191 = arith.mulf %186, %190 : vector<8x32xf32>
    %192 = arith.addf %188, %191 : vector<8x32xf32>
    %193 = math.tanh %192 : vector<8x32xf32>
    %cst_44 = arith.constant 1.000000e+00 : f32
    %194 = vector.broadcast %cst_44 : f32 to vector<8x32xf32>
    %195 = arith.subf %194, %187 : vector<8x32xf32>
    %196 = arith.mulf %195, %193 : vector<8x32xf32>
    %197 = arith.mulf %187, %175 : vector<8x32xf32>
    %198 = arith.addf %196, %197 : vector<8x32xf32>
    %c0_45 = arith.constant 0 : index
    %c0_46 = arith.constant 0 : index
    %199 = vector.load %arg4[%c0_45, %c0_46] : memref<8x32xf32, #tpu.memory_space<vmem>>, vector<8x32xf32>
    tpu.vector_store %arg4[%c0_45, %c0_46], %198 {strides = array<i32>} : memref<8x32xf32, #tpu.memory_space<vmem>>, vector<8x32xf32>,
    return
  }
}

</mosaic_0001>

<llo_original>
// kernel: tpu_custom_call.1
$region0: #{tpu_custom_call.1}
  #allocation0 [shape = 'u32[]', space=smem, size = 0x4, offset = 0x4, fixed_abs, tag = 'smem constant byte address 0x4 - core index']
  #allocation1 [shape = 'u32[72,128]{1,0:T(1,128)}', space=vmem, size = 0x9000, scoped, tag = 'internal scratch']
  #allocation2 [shape = 'f32[64,96]{1,0:T(8,128)}', space=vmem, size = 0x8000, scoped, tag = 'scratch operand']
  %s0 = inlined_call_operand.vmem [shape: s32[64,1], index: 0, kind: input, shape index: {}]
  %s1 = inlined_call_operand.vmem [shape: f32[50,96], index: 1, kind: input, shape index: {}]
  %s2 = inlined_call_operand.hbm [shape: f32[32,96], index: 2, kind: input, shape index: {}]
  %s3 = inlined_call_operand.vmem [shape: f32[1,32], index: 3, kind: input, shape index: {}]
  %s4 = inlined_call_operand.hbm [shape: f32[8,32], index: 4, kind: output, shape index: {}]
  %s5 = sld [smem:[#allocation0]]
  $region30: #{tpu_custom_call.1} parent=0
    _
  %s7 = ssub.s32 1, %s5
  %s8 = scalar_select 0, %s7, %s5
  $region1: #{tpu_custom_call.1} parent=0
    #allocation3 [shape = 'u8[16384]{0}', space=vmem, size = 0x4000, scoped, tag = 'input window, operand 2, single buffered']
    #allocation4 [shape = 's32[1]{0}', space=sflag, size = 0x4, scoped, tag = 'scoped memory for tpu_custom_call.1']
    #allocation5 [shape = 's32[1]{0}', space=sflag, size = 0x4, scoped, tag = 'scoped memory for tpu_custom_call.1']
    #allocation6 [shape = 'u8[4096]{0}', space=vmem, size = 0x1000, scoped, tag = 'output window, operand 0, single buffered']
    %9 = vsyncpa [#allocation4], 0
    %10 = vsyncpa [#allocation5], 0
    // Predicated region
    $region2: #{tpu_custom_call.1} parent=1 // pred_check
      _
    $region3: #{tpu_custom_call.1} parent=1 // pred_check_branch
      %12 = sbr.rel (0) target = $region5
    $region4: #{tpu_custom_call.1} parent=1 // pred_region
      _
    $region5: #{tpu_custom_call.1} parent=1 // pred_fallthru
      _
    // Predicated region
    $region6: #{tpu_custom_call.1} parent=1 // pred_check
      _
    $region7: #{tpu_custom_call.1} parent=1 // pred_check_branch
      %14 = sbr.rel (0) target = $region9
    $region8: #{tpu_custom_call.1} parent=1 // pred_region
      _
    $region9: #{tpu_custom_call.1} parent=1 // pred_fallthru
      _
    // Predicated region
    $region10: #{tpu_custom_call.1} parent=1 // pred_check
      _
    $region11: #{tpu_custom_call.1} parent=1 // pred_check_branch
      %16 = sbr.rel (0) target = $region13
    $region12: #{tpu_custom_call.1} parent=1 // pred_region
      %18 = vsyncadd [#allocation4], 0
      %s19 = sshll.u32 %s2, 4
      %s20 = int_to_ptr.hbm [resolvable:$true] %s19
      %s21 = sshll.u32 [#allocation3], 4
      %s22 = int_to_ptr.vmem [resolvable:$true] %s21
      %27 = dma.hbm_to_vmem [thread:$0]  %s20, 512, %s22, [#allocation4], 128, 128, 8
    $region13: #{tpu_custom_call.1} parent=1 // pred_fallthru
      _
    // Predicated region
    $region14: #{tpu_custom_call.1} parent=1 // pred_check
      _
    $region15: #{tpu_custom_call.1} parent=1 // pred_check_branch
      %29 = sbr.rel (0) target = $region17
    $region16: #{tpu_custom_call.1} parent=1 // pred_region
      _
    $region17: #{tpu_custom_call.1} parent=1 // pred_fallthru
      _
    // Predicated region
    $region18: #{tpu_custom_call.1} parent=1 // pred_check
      _
    $region19: #{tpu_custom_call.1} parent=1 // pred_check_branch
      %31 = sbr.rel (0) target = $region21
    $region20: #{tpu_custom_call.1} parent=1 // pred_region
      %33 = dma.done [#allocation4], 512
    $region21: #{tpu_custom_call.1} parent=1 // pred_fallthru
      _
    %v34 = vld [vmem:[%s0] sm:$0xff]
    %v35 = vld [vmem:[%s0 + $0x8] sm:$0xff]
    %v36 = vld [vmem:[%s0 + $0x10] sm:$0xff]
    %v37 = vld [vmem:[%s0 + $0x18] sm:$0xff]
    %v38 = vld [vmem:[%s0 + $0x20] sm:$0xff]
    %v39 = vld [vmem:[%s0 + $0x28] sm:$0xff]
    %v40 = vld [vmem:[%s0 + $0x30] sm:$0xff]
    %v41 = vld [vmem:[%s0 + $0x38] sm:$0xff]
    %v42 = vlaneseq
    %v43 = vand.u32 %v42, 127
    %44 = vset.pattern.permute.xlu0 0
    %45 = vperm.xlu0 %44, %v34
    %v46 = vpop.permute.xlu0 %45
    %47 = vset.pattern.permute.xlu0 0
    %48 = vperm.xlu0 %47, %v35
    %v49 = vpop.permute.xlu0 %48
    %50 = vset.pattern.permute.xlu0 0
    %51 = vperm.xlu0 %50, %v36
    %v52 = vpop.permute.xlu0 %51
    %53 = vset.pattern.permute.xlu0 0
    %54 = vperm.xlu0 %53, %v37
    %v55 = vpop.permute.xlu0 %54
    %56 = vset.pattern.permute.xlu0 0
    %57 = vperm.xlu0 %56, %v38
    %v58 = vpop.permute.xlu0 %57
    %59 = vset.pattern.permute.xlu0 0
    %60 = vperm.xlu0 %59, %v39
    %v61 = vpop.permute.xlu0 %60
    %62 = vset.pattern.permute.xlu0 0
    %63 = vperm.xlu0 %62, %v40
    %v64 = vpop.permute.xlu0 %63
    %65 = vset.pattern.permute.xlu0 0
    %66 = vperm.xlu0 %65, %v41
    %v67 = vpop.permute.xlu0 %66
    %vm68 = vcmp.eq.s32.totalorder %v46, %v43
    %vm69 = vcmp.eq.s32.totalorder %v49, %v43
    %vm70 = vcmp.eq.s32.totalorder %v52, %v43
    %vm71 = vcmp.eq.s32.totalorder %v55, %v43
    %vm72 = vcmp.eq.s32.totalorder %v58, %v43
    %vm73 = vcmp.eq.s32.totalorder %v61, %v43
    %vm74 = vcmp.eq.s32.totalorder %v64, %v43
    %vm75 = vcmp.eq.s32.totalorder %v67, %v43
    %v76 = vsel %vm68, 1.0, 0.0
    %v77 = vsel %vm69, 1.0, 0.0
    %v78 = vsel %vm70, 1.0, 0.0
    %v79 = vsel %vm71, 1.0, 0.0
    %v80 = vsel %vm72, 1.0, 0.0
    %v81 = vsel %vm73, 1.0, 0.0
    %v82 = vsel %vm74, 1.0, 0.0
    %v83 = vsel %vm75, 1.0, 0.0
    %v84 = vld [vmem:[%s1] sm:$0xff]
    %v85 = vld [vmem:[%s1 + $0x8] sm:$0xff]
    %v86 = vld [vmem:[%s1 + $0x10] sm:$0xff]
    %v87 = vld [vmem:[%s1 + $0x18] sm:$0xff]
    %v88 = vld [vmem:[%s1 + $0x20] sm:$0xff]
    %v89 = vld [vmem:[%s1 + $0x28] sm:$0xff]
    %v90 = vld [vmem:[%s1 + $0x30] sm:$0x3]
    %vm91 = vcmask 408576
    %v93 = vsel %vm91, %v76, 0
    %v96 = vsel %vm91, %v77, 0
    %v99 = vsel %vm91, %v78, 0
    %v102 = vsel %vm91, %v79, 0
    %v105 = vsel %vm91, %v80, 0
    %v108 = vsel %vm91, %v81, 0
    %v111 = vsel %vm91, %v82, 0
    %v114 = vsel %vm91, %v83, 0
    %vm116 = vcmask 1041408
    %v118 = vsel %vm116, %v90, 0
    %120 = vmatpush.msra.mxu0 0.0
    %121 = vmatpush.msra.mxu0 0.0
    %122 = vmatpush.msra.mxu0 0.0
    %123 = vmatpush.msra.mxu0 0.0
    %124 = vmatpush.msra.mxu0 0.0
    %125 = vmatpush.msra.mxu0 0.0
    %126 = vmatpush.msra.mxu0 0.0
    %127 = vmatpush.msra.mxu0 0.0
    %128 = vmatpush.msra.mxu0 0.0
    %129 = vmatpush.msra.mxu0 %v118
    %130 = vmatpush.msra.mxu0 %v89
    %131 = vmatpush.msra.mxu0 %v88
    %132 = vmatpush.msra.mxu0 %v87
    %133 = vmatpush.msra.mxu0 %v86
    %134 = vmatpush.msra.mxu0 %v85
    %135 = vmatpush.msra.mxu0 %v84
    %136 = vmatmul.f32.gmra.mxu0 %v93
    %v137 = vpop.f32.mrf.mxu0
    %v138 = vadd.f32 0.0, %v137
    %139 = vmatmul.f32.gmra.mxu0 %v96
    %v140 = vpop.f32.mrf.mxu0
    %v141 = vadd.f32 0.0, %v140
    %142 = vmatmul.f32.gmra.mxu0 %v99
    %v143 = vpop.f32.mrf.mxu0
    %v144 = vadd.f32 0.0, %v143
    %145 = vmatmul.f32.gmra.mxu0 %v102
    %v146 = vpop.f32.mrf.mxu0
    %v147 = vadd.f32 0.0, %v146
    %148 = vmatmul.f32.gmra.mxu0 %v105
    %v149 = vpop.f32.mrf.mxu0
    %v150 = vadd.f32 0.0, %v149
    %151 = vmatmul.f32.gmra.mxu0 %v108
    %v152 = vpop.f32.mrf.mxu0
    %v153 = vadd.f32 0.0, %v152
    %154 = vmatmul.f32.gmra.mxu0 %v111
    %v155 = vpop.f32.mrf.mxu0
    %v156 = vadd.f32 0.0, %v155
    %157 = vmatmul.f32.gmra.mxu0 %v114
    %v158 = vpop.f32.mrf.mxu0
    %v159 = vadd.f32 0.0, %v158
    %160 = vdwg.mxu0
    %vm161 = vcmask 785408
    %162 = vst.msk [vmem:[#allocation2] sm:$0xff] %vm161, %v138
    %163 = vst.msk [vmem:[#allocation2 + $0x8] sm:$0xff] %vm161, %v141
    %164 = vst.msk [vmem:[#allocation2 + $0x10] sm:$0xff] %vm161, %v144
    %165 = vst.msk [vmem:[#allocation2 + $0x18] sm:$0xff] %vm161, %v147
    %166 = vst.msk [vmem:[#allocation2 + $0x20] sm:$0xff] %vm161, %v150
    %167 = vst.msk [vmem:[#allocation2 + $0x28] sm:$0xff] %vm161, %v153
    %168 = vst.msk [vmem:[#allocation2 + $0x30] sm:$0xff] %vm161, %v156
    %169 = vst.msk [vmem:[#allocation2 + $0x38] sm:$0xff] %vm161, %v159
    %v170 = vld [vmem:[#allocation3] sm:$0xff]
    %v171 = vld [vmem:[#allocation3 + $0x8] sm:$0xff]
    %v172 = vld [vmem:[#allocation3 + $0x10] sm:$0xff]
    %v173 = vld [vmem:[#allocation3 + $0x18] sm:$0xff]
    %v174 = vld [vmem:[%s3] sm:$0x1]
    %v176 = vperm.slane %v174, 0
    %v177 = vld [vmem:[#allocation2] sm:$0xff]
    %vm178 = vcmask 261120
    %v180 = vsel %vm178, 0.0, 0
    %182 = vmatpush.msra.mxu0 0.0
    %183 = vmatpush.msra.mxu0 0.0
    %184 = vmatpush.msra.mxu0 0.0
    %185 = vmatpush.msra.mxu0 0.0
    %186 = vmatpush.msra.mxu0 0.0
    %187 = vmatpush.msra.mxu0 0.0
    %188 = vmatpush.msra.mxu0 0.0
    %189 = vmatpush.msra.mxu0 0.0
    %190 = vmatpush.msra.mxu0 0.0
    %191 = vmatpush.msra.mxu0 0.0
    %192 = vmatpush.msra.mxu0 0.0
    %193 = vmatpush.msra.mxu0 0.0
    %194 = vmatpush.msra.mxu0 %v173
    %195 = vmatpush.msra.mxu0 %v172
    %196 = vmatpush.msra.mxu0 %v171
    %197 = vmatpush.msra.mxu0 %v170
    %198 = vmatmul.f32.gmra.mxu0 %v180
    %v199 = vpop.f32.mrf.mxu0
    %v200 = vadd.f32 0.0, %v199
    %201 = vdwg.mxu0
    %v202 = vadd.f32 %v177, %v200
    %v203 = vxor.u32 %v202, 2147483648
    %v204 = vmul.f32 %v203, 1.442695
    %v205 = vpow.pop %v204
    %v206 = vadd.f32 %v205, 1.0
    %v207 = vrcp.pop %v206
    %v208 = vmul.f32 %v206, %v207
    %v209 = vsub.f32 1.0, %v208
    %v210 = vmul.f32 %v207, %v209
    %v211 = vadd.f32 %v207, %v210
    %vm212 = vweird.f32 %v206
    %vm213 = vweird.f32 %v207
    %vm214 = vmor %vm212, %vm213
    %v215 = vsel %vm214, %v207, %v211
    %v216 = vand.u32 2147483647, %v206
    %vm217 = vcmp.eq.f32.partialorder %v216, 8.507059e+37
    %v218 = vand.u32 %v206, 2147483648
    %v219 = vor.u32 1.1754944e-38, %v218
    %v220 = vsel %vm217, %v219, %v215
    %v221 = vmul.f32 1.0, %v220
    %222 = vrot.lane.b32.xlu0 %v176, 64
    %v223 = vpop.permute.xlu0 %222
    %v225 = vadd.f32 %v200, %v223
    %227 = vrot.lane.b32.xlu0 %v225, 64
    %v228 = vpop.permute.xlu0 %227
    %v230 = vmul.f32 %v221, %v228
    %232 = vrot.lane.b32.xlu0 %v230, 64
    %v233 = vpop.permute.xlu0 %232
    %v235 = vadd.f32 %v177, %v233
    %v236 = vtanh.pop %v235
    %v237 = vsub.f32 1.0, %v221
    %239 = vrot.lane.b32.xlu0 %v236, 96
    %v240 = vpop.permute.xlu0 %239
    %v242 = vmul.f32 %v237, %v240
    %v243 = vmul.f32 %v221, 0.0
    %v244 = vadd.f32 %v242, %v243
    %v245 = vld [vmem:[#allocation2 + $0x8] sm:$0xff]
    %247 = vrot.lane.b32.xlu0 %v244, 96
    %v248 = vpop.permute.xlu0 %247
    %v249 = vsel %vm178, %v248, 0
    %251 = vmatpush.msra.mxu0 0.0
    %252 = vmatpush.msra.mxu0 0.0
    %253 = vmatpush.msra.mxu0 0.0
    %254 = vmatpush.msra.mxu0 0.0
    %255 = vmatpush.msra.mxu0 0.0
    %256 = vmatpush.msra.mxu0 0.0
    %257 = vmatpush.msra.mxu0 0.0
    %258 = vmatpush.msra.mxu0 0.0
    %259 = vmatpush.msra.mxu0 0.0
    %260 = vmatpush.msra.mxu0 0.0
    %261 = vmatpush.msra.mxu0 0.0
    %262 = vmatpush.msra.mxu0 0.0
    %263 = vmatpush.msra.mxu0 %v173
    %264 = vmatpush.msra.mxu0 %v172
    %265 = vmatpush.msra.mxu0 %v171
    %266 = vmatpush.msra.mxu0 %v170
    %267 = vmatmul.f32.gmra.mxu0 %v249
    %v268 = vpop.f32.mrf.mxu0
    %v269 = vadd.f32 0.0, %v268
    %270 = vdwg.mxu0
    %v271 = vadd.f32 %v245, %v269
    %v272 = vxor.u32 %v271, 2147483648
    %v273 = vmul.f32 %v272, 1.442695
    %v274 = vpow.pop %v273
    %v275 = vadd.f32 %v274, 1.0
    %v276 = vrcp.pop %v275
    %v277 = vmul.f32 %v275, %v276
    %v278 = vsub.f32 1.0, %v277
    %v279 = vmul.f32 %v276, %v278
    %v280 = vadd.f32 %v276, %v279
    %vm281 = vweird.f32 %v275
    %vm282 = vweird.f32 %v276
    %vm283 = vmor %vm281, %vm282
    %v284 = vsel %vm283, %v276, %v280
    %v285 = vand.u32 2147483647, %v275
    %vm286 = vcmp.eq.f32.partialorder %v285, 8.507059e+37
    %v287 = vand.u32 %v275, 2147483648
    %v288 = vor.u32 1.1754944e-38, %v287
    %v289 = vsel %vm286, %v288, %v284
    %v290 = vmul.f32 1.0, %v289
    %v291 = vadd.f32 %v269, %v223
    %293 = vrot.lane.b32.xlu0 %v291, 64
    %v294 = vpop.permute.xlu0 %293
    %v296 = vmul.f32 %v290, %v294
    %298 = vrot.lane.b32.xlu0 %v296, 64
    %v299 = vpop.permute.xlu0 %298
    %v301 = vadd.f32 %v245, %v299
    %v302 = vtanh.pop %v301
    %v303 = vsub.f32 1.0, %v290
    %305 = vrot.lane.b32.xlu0 %v302, 96
    %v306 = vpop.permute.xlu0 %305
    %v308 = vmul.f32 %v303, %v306
    %v309 = vmul.f32 %v290, %v244
    %v310 = vadd.f32 %v308, %v309
    %v311 = vld [vmem:[#allocation2 + $0x10] sm:$0xff]
    %313 = vrot.lane.b32.xlu0 %v310, 96
    %v314 = vpop.permute.xlu0 %313
    %v315 = vsel %vm178, %v314, 0
    %317 = vmatpush.msra.mxu0 0.0
    %318 = vmatpush.msra.mxu0 0.0
    %319 = vmatpush.msra.mxu0 0.0
    %320 = vmatpush.msra.mxu0 0.0
    %321 = vmatpush.msra.mxu0 0.0
    %322 = vmatpush.msra.mxu0 0.0
    %323 = vmatpush.msra.mxu0 0.0
    %324 = vmatpush.msra.mxu0 0.0
    %325 = vmatpush.msra.mxu0 0.0
    %326 = vmatpush.msra.mxu0 0.0
    %327 = vmatpush.msra.mxu0 0.0
    %328 = vmatpush.msra.mxu0 0.0
    %329 = vmatpush.msra.mxu0 %v173
    %330 = vmatpush.msra.mxu0 %v172
    %331 = vmatpush.msra.mxu0 %v171
    %332 = vmatpush.msra.mxu0 %v170
    %333 = vmatmul.f32.gmra.mxu0 %v315
    %v334 = vpop.f32.mrf.mxu0
    %v335 = vadd.f32 0.0, %v334
    %336 = vdwg.mxu0
    %v337 = vadd.f32 %v311, %v335
    %v338 = vxor.u32 %v337, 2147483648
    %v339 = vmul.f32 %v338, 1.442695
    %v340 = vpow.pop %v339
    %v341 = vadd.f32 %v340, 1.0
    %v342 = vrcp.pop %v341
    %v343 = vmul.f32 %v341, %v342
    %v344 = vsub.f32 1.0, %v343
    %v345 = vmul.f32 %v342, %v344
    %v346 = vadd.f32 %v342, %v345
    %vm347 = vweird.f32 %v341
    %vm348 = vweird.f32 %v342
    %vm349 = vmor %vm347, %vm348
    %v350 = vsel %vm349, %v342, %v346
    %v351 = vand.u32 2147483647, %v341
    %vm352 = vcmp.eq.f32.partialorder %v351, 8.507059e+37
    %v353 = vand.u32 %v341, 2147483648
    %v354 = vor.u32 1.1754944e-38, %v353
    %v355 = vsel %vm352, %v354, %v350
    %v356 = vmul.f32 1.0, %v355
    %v357 = vadd.f32 %v335, %v223
    %359 = vrot.lane.b32.xlu0 %v357, 64
    %v360 = vpop.permute.xlu0 %359
    %v362 = vmul.f32 %v356, %v360
    %364 = vrot.lane.b32.xlu0 %v362, 64
    %v365 = vpop.permute.xlu0 %364
    %v367 = vadd.f32 %v311, %v365
    %v368 = vtanh.pop %v367
    %v369 = vsub.f32 1.0, %v356
    %371 = vrot.lane.b32.xlu0 %v368, 96
    %v372 = vpop.permute.xlu0 %371
    %v374 = vmul.f32 %v369, %v372
    %v375 = vmul.f32 %v356, %v310
    %v376 = vadd.f32 %v374, %v375
    %v377 = vld [vmem:[#allocation2 + $0x18] sm:$0xff]
    %379 = vrot.lane.b32.xlu0 %v376, 96
    %v380 = vpop.permute.xlu0 %379
    %v381 = vsel %vm178, %v380, 0
    %383 = vmatpush.msra.mxu0 0.0
    %384 = vmatpush.msra.mxu0 0.0
    %385 = vmatpush.msra.mxu0 0.0
    %386 = vmatpush.msra.mxu0 0.0
    %387 = vmatpush.msra.mxu0 0.0
    %388 = vmatpush.msra.mxu0 0.0
    %389 = vmatpush.msra.mxu0 0.0
    %390 = vmatpush.msra.mxu0 0.0
    %391 = vmatpush.msra.mxu0 0.0
    %392 = vmatpush.msra.mxu0 0.0
    %393 = vmatpush.msra.mxu0 0.0
    %394 = vmatpush.msra.mxu0 0.0
    %395 = vmatpush.msra.mxu0 %v173
    %396 = vmatpush.msra.mxu0 %v172
    %397 = vmatpush.msra.mxu0 %v171
    %398 = vmatpush.msra.mxu0 %v170
    %399 = vmatmul.f32.gmra.mxu0 %v381
    %v400 = vpop.f32.mrf.mxu0
    %v401 = vadd.f32 0.0, %v400
    %402 = vdwg.mxu0
    %v403 = vadd.f32 %v377, %v401
    %v404 = vxor.u32 %v403, 2147483648
    %v405 = vmul.f32 %v404, 1.442695
    %v406 = vpow.pop %v405
    %v407 = vadd.f32 %v406, 1.0
    %v408 = vrcp.pop %v407
    %v409 = vmul.f32 %v407, %v408
    %v410 = vsub.f32 1.0, %v409
    %v411 = vmul.f32 %v408, %v410
    %v412 = vadd.f32 %v408, %v411
    %vm413 = vweird.f32 %v407
    %vm414 = vweird.f32 %v408
    %vm415 = vmor %vm413, %vm414
    %v416 = vsel %vm415, %v408, %v412
    %v417 = vand.u32 2147483647, %v407
    %vm418 = vcmp.eq.f32.partialorder %v417, 8.507059e+37
    %v419 = vand.u32 %v407, 2147483648
    %v420 = vor.u32 1.1754944e-38, %v419
    %v421 = vsel %vm418, %v420, %v416
    %v422 = vmul.f32 1.0, %v421
    %v423 = vadd.f32 %v401, %v223
    %425 = vrot.lane.b32.xlu0 %v423, 64
    %v426 = vpop.permute.xlu0 %425
    %v428 = vmul.f32 %v422, %v426
    %430 = vrot.lane.b32.xlu0 %v428, 64
    %v431 = vpop.permute.xlu0 %430
    %v433 = vadd.f32 %v377, %v431
    %v434 = vtanh.pop %v433
    %v435 = vsub.f32 1.0, %v422
    %437 = vrot.lane.b32.xlu0 %v434, 96
    %v438 = vpop.permute.xlu0 %437
    %v440 = vmul.f32 %v435, %v438
    %v441 = vmul.f32 %v422, %v376
    %v442 = vadd.f32 %v440, %v441
    %v443 = vld [vmem:[#allocation2 + $0x20] sm:$0xff]
    %445 = vrot.lane.b32.xlu0 %v442, 96
    %v446 = vpop.permute.xlu0 %445
    %v447 = vsel %vm178, %v446, 0
    %449 = vmatpush.msra.mxu0 0.0
    %450 = vmatpush.msra.mxu0 0.0
    %451 = vmatpush.msra.mxu0 0.0
    %452 = vmatpush.msra.mxu0 0.0
    %453 = vmatpush.msra.mxu0 0.0
    %454 = vmatpush.msra.mxu0 0.0
    %455 = vmatpush.msra.mxu0 0.0
    %456 = vmatpush.msra.mxu0 0.0
    %457 = vmatpush.msra.mxu0 0.0
    %458 = vmatpush.msra.mxu0 0.0
    %459 = vmatpush.msra.mxu0 0.0
    %460 = vmatpush.msra.mxu0 0.0
    %461 = vmatpush.msra.mxu0 %v173
    %462 = vmatpush.msra.mxu0 %v172
    %463 = vmatpush.msra.mxu0 %v171
    %464 = vmatpush.msra.mxu0 %v170
    %465 = vmatmul.f32.gmra.mxu0 %v447
    %v466 = vpop.f32.mrf.mxu0
    %v467 = vadd.f32 0.0, %v466
    %468 = vdwg.mxu0
    %v469 = vadd.f32 %v443, %v467
    %v470 = vxor.u32 %v469, 2147483648
    %v471 = vmul.f32 %v470, 1.442695
    %v472 = vpow.pop %v471
    %v473 = vadd.f32 %v472, 1.0
    %v474 = vrcp.pop %v473
    %v475 = vmul.f32 %v473, %v474
    %v476 = vsub.f32 1.0, %v475
    %v477 = vmul.f32 %v474, %v476
    %v478 = vadd.f32 %v474, %v477
    %vm479 = vweird.f32 %v473
    %vm480 = vweird.f32 %v474
    %vm481 = vmor %vm479, %vm480
    %v482 = vsel %vm481, %v474, %v478
    %v483 = vand.u32 2147483647, %v473
    %vm484 = vcmp.eq.f32.partialorder %v483, 8.507059e+37
    %v485 = vand.u32 %v473, 2147483648
    %v486 = vor.u32 1.1754944e-38, %v485
    %v487 = vsel %vm484, %v486, %v482
    %v488 = vmul.f32 1.0, %v487
    %v489 = vadd.f32 %v467, %v223
    %491 = vrot.lane.b32.xlu0 %v489, 64
    %v492 = vpop.permute.xlu0 %491
    %v494 = vmul.f32 %v488, %v492
    %496 = vrot.lane.b32.xlu0 %v494, 64
    %v497 = vpop.permute.xlu0 %496
    %v499 = vadd.f32 %v443, %v497
    %v500 = vtanh.pop %v499
    %v501 = vsub.f32 1.0, %v488
    %503 = vrot.lane.b32.xlu0 %v500, 96
    %v504 = vpop.permute.xlu0 %503
    %v506 = vmul.f32 %v501, %v504
    %v507 = vmul.f32 %v488, %v442
    %v508 = vadd.f32 %v506, %v507
    %v509 = vld [vmem:[#allocation2 + $0x28] sm:$0xff]
    %511 = vrot.lane.b32.xlu0 %v508, 96
    %v512 = vpop.permute.xlu0 %511
    %v513 = vsel %vm178, %v512, 0
    %515 = vmatpush.msra.mxu0 0.0
    %516 = vmatpush.msra.mxu0 0.0
    %517 = vmatpush.msra.mxu0 0.0
    %518 = vmatpush.msra.mxu0 0.0
    %519 = vmatpush.msra.mxu0 0.0
    %520 = vmatpush.msra.mxu0 0.0
    %521 = vmatpush.msra.mxu0 0.0
    %522 = vmatpush.msra.mxu0 0.0
    %523 = vmatpush.msra.mxu0 0.0
    %524 = vmatpush.msra.mxu0 0.0
    %525 = vmatpush.msra.mxu0 0.0
    %526 = vmatpush.msra.mxu0 0.0
    %527 = vmatpush.msra.mxu0 %v173
    %528 = vmatpush.msra.mxu0 %v172
    %529 = vmatpush.msra.mxu0 %v171
    %530 = vmatpush.msra.mxu0 %v170
    %531 = vmatmul.f32.gmra.mxu0 %v513
    %v532 = vpop.f32.mrf.mxu0
    %v533 = vadd.f32 0.0, %v532
    %534 = vdwg.mxu0
    %v535 = vadd.f32 %v509, %v533
    %v536 = vxor.u32 %v535, 2147483648
    %v537 = vmul.f32 %v536, 1.442695
    %v538 = vpow.pop %v537
    %v539 = vadd.f32 %v538, 1.0
    %v540 = vrcp.pop %v539
    %v541 = vmul.f32 %v539, %v540
    %v542 = vsub.f32 1.0, %v541
    %v543 = vmul.f32 %v540, %v542
    %v544 = vadd.f32 %v540, %v543
    %vm545 = vweird.f32 %v539
    %vm546 = vweird.f32 %v540
    %vm547 = vmor %vm545, %vm546
    %v548 = vsel %vm547, %v540, %v544
    %v549 = vand.u32 2147483647, %v539
    %vm550 = vcmp.eq.f32.partialorder %v549, 8.507059e+37
    %v551 = vand.u32 %v539, 2147483648
    %v552 = vor.u32 1.1754944e-38, %v551
    %v553 = vsel %vm550, %v552, %v548
    %v554 = vmul.f32 1.0, %v553
    %v555 = vadd.f32 %v533, %v223
    %557 = vrot.lane.b32.xlu0 %v555, 64
    %v558 = vpop.permute.xlu0 %557
    %v560 = vmul.f32 %v554, %v558
    %562 = vrot.lane.b32.xlu0 %v560, 64
    %v563 = vpop.permute.xlu0 %562
    %v565 = vadd.f32 %v509, %v563
    %v566 = vtanh.pop %v565
    %v567 = vsub.f32 1.0, %v554
    %569 = vrot.lane.b32.xlu0 %v566, 96
    %v570 = vpop.permute.xlu0 %569
    %v572 = vmul.f32 %v567, %v570
    %v573 = vmul.f32 %v554, %v508
    %v574 = vadd.f32 %v572, %v573
    %v575 = vld [vmem:[#allocation2 + $0x30] sm:$0xff]
    %577 = vrot.lane.b32.xlu0 %v574, 96
    %v578 = vpop.permute.xlu0 %577
    %v579 = vsel %vm178, %v578, 0
    %581 = vmatpush.msra.mxu0 0.0
    %582 = vmatpush.msra.mxu0 0.0
    %583 = vmatpush.msra.mxu0 0.0
    %584 = vmatpush.msra.mxu0 0.0
    %585 = vmatpush.msra.mxu0 0.0
    %586 = vmatpush.msra.mxu0 0.0
    %587 = vmatpush.msra.mxu0 0.0
    %588 = vmatpush.msra.mxu0 0.0
    %589 = vmatpush.msra.mxu0 0.0
    %590 = vmatpush.msra.mxu0 0.0
    %591 = vmatpush.msra.mxu0 0.0
    %592 = vmatpush.msra.mxu0 0.0
    %593 = vmatpush.msra.mxu0 %v173
    %594 = vmatpush.msra.mxu0 %v172
    %595 = vmatpush.msra.mxu0 %v171
    %596 = vmatpush.msra.mxu0 %v170
    %597 = vmatmul.f32.gmra.mxu0 %v579
    %v598 = vpop.f32.mrf.mxu0
    %v599 = vadd.f32 0.0, %v598
    %600 = vdwg.mxu0
    %v601 = vadd.f32 %v575, %v599
    %v602 = vxor.u32 %v601, 2147483648
    %v603 = vmul.f32 %v602, 1.442695
    %v604 = vpow.pop %v603
    %v605 = vadd.f32 %v604, 1.0
    %v606 = vrcp.pop %v605
    %v607 = vmul.f32 %v605, %v606
    %v608 = vsub.f32 1.0, %v607
    %v609 = vmul.f32 %v606, %v608
    %v610 = vadd.f32 %v606, %v609
    %vm611 = vweird.f32 %v605
    %vm612 = vweird.f32 %v606
    %vm613 = vmor %vm611, %vm612
    %v614 = vsel %vm613, %v606, %v610
    %v615 = vand.u32 2147483647, %v605
    %vm616 = vcmp.eq.f32.partialorder %v615, 8.507059e+37
    %v617 = vand.u32 %v605, 2147483648
    %v618 = vor.u32 1.1754944e-38, %v617
    %v619 = vsel %vm616, %v618, %v614
    %v620 = vmul.f32 1.0, %v619
    %v621 = vadd.f32 %v599, %v223
    %623 = vrot.lane.b32.xlu0 %v621, 64
    %v624 = vpop.permute.xlu0 %623
    %v626 = vmul.f32 %v620, %v624
    %628 = vrot.lane.b32.xlu0 %v626, 64
    %v629 = vpop.permute.xlu0 %628
    %v631 = vadd.f32 %v575, %v629
    %v632 = vtanh.pop %v631
    %v633 = vsub.f32 1.0, %v620
    %635 = vrot.lane.b32.xlu0 %v632, 96
    %v636 = vpop.permute.xlu0 %635
    %v638 = vmul.f32 %v633, %v636
    %v639 = vmul.f32 %v620, %v574
    %v640 = vadd.f32 %v638, %v639
    %v641 = vld [vmem:[#allocation2 + $0x38] sm:$0xff]
    %643 = vrot.lane.b32.xlu0 %v640, 96
    %v644 = vpop.permute.xlu0 %643
    %v645 = vsel %vm178, %v644, 0
    %647 = vmatpush.msra.mxu0 0.0
    %648 = vmatpush.msra.mxu0 0.0
    %649 = vmatpush.msra.mxu0 0.0
    %650 = vmatpush.msra.mxu0 0.0
    %651 = vmatpush.msra.mxu0 0.0
    %652 = vmatpush.msra.mxu0 0.0
    %653 = vmatpush.msra.mxu0 0.0
    %654 = vmatpush.msra.mxu0 0.0
    %655 = vmatpush.msra.mxu0 0.0
    %656 = vmatpush.msra.mxu0 0.0
    %657 = vmatpush.msra.mxu0 0.0
    %658 = vmatpush.msra.mxu0 0.0
    %659 = vmatpush.msra.mxu0 %v173
    %660 = vmatpush.msra.mxu0 %v172
    %661 = vmatpush.msra.mxu0 %v171
    %662 = vmatpush.msra.mxu0 %v170
    %663 = vmatmul.f32.gmra.mxu0 %v645
    %v664 = vpop.f32.mrf.mxu0
    %v665 = vadd.f32 0.0, %v664
    %666 = vdwg.mxu0
    %v667 = vadd.f32 %v641, %v665
    %v668 = vxor.u32 %v667, 2147483648
    %v669 = vmul.f32 %v668, 1.442695
    %v670 = vpow.pop %v669
    %v671 = vadd.f32 %v670, 1.0
    %v672 = vrcp.pop %v671
    %v673 = vmul.f32 %v671, %v672
    %v674 = vsub.f32 1.0, %v673
    %v675 = vmul.f32 %v672, %v674
    %v676 = vadd.f32 %v672, %v675
    %vm677 = vweird.f32 %v671
    %vm678 = vweird.f32 %v672
    %vm679 = vmor %vm677, %vm678
    %v680 = vsel %vm679, %v672, %v676
    %v681 = vand.u32 2147483647, %v671
    %vm682 = vcmp.eq.f32.partialorder %v681, 8.507059e+37
    %v683 = vand.u32 %v671, 2147483648
    %v684 = vor.u32 1.1754944e-38, %v683
    %v685 = vsel %vm682, %v684, %v680
    %v686 = vmul.f32 1.0, %v685
    %v687 = vadd.f32 %v665, %v223
    %689 = vrot.lane.b32.xlu0 %v687, 64
    %v690 = vpop.permute.xlu0 %689
    %v692 = vmul.f32 %v686, %v690
    %694 = vrot.lane.b32.xlu0 %v692, 64
    %v695 = vpop.permute.xlu0 %694
    %v697 = vadd.f32 %v641, %v695
    %v698 = vtanh.pop %v697
    %v699 = vsub.f32 1.0, %v686
    %701 = vrot.lane.b32.xlu0 %v698, 96
    %v702 = vpop.permute.xlu0 %701
    %v704 = vmul.f32 %v699, %v702
    %v705 = vmul.f32 %v686, %v640
    %v706 = vadd.f32 %v704, %v705
    %708 = vrot.lane.b32.xlu0 %v706, 96
    %v709 = vpop.permute.xlu0 %708
    %711 = vst.msk [vmem:[#allocation6] sm:$0xff] %vm178, %v709
    // Predicated region
    $region22: #{tpu_custom_call.1} parent=1 // pred_check
      _
    $region23: #{tpu_custom_call.1} parent=1 // pred_check_branch
      %713 = sbr.rel (0) target = $region25
    $region24: #{tpu_custom_call.1} parent=1 // pred_region
      %715 = vsyncadd [#allocation5], 0
      %s717 = sshll.u32 [#allocation6], 4
      %s718 = int_to_ptr.vmem [resolvable:$true] %s717
      %s719 = sshll.u32 %s4, 4
      %s720 = int_to_ptr.hbm [resolvable:$true] %s719
      %722 = dma.vmem_to_hbm [thread:$0]  %s718, 128, %s720, [#allocation5]
    $region25: #{tpu_custom_call.1} parent=1 // pred_fallthru
      _
    // Predicated region
    $region26: #{tpu_custom_call.1} parent=1 // pred_check
      _
    $region27: #{tpu_custom_call.1} parent=1 // pred_check_branch
      %724 = sbr.rel (0) target = $region29
    $region28: #{tpu_custom_call.1} parent=1 // pred_region
      %726 = dma.done [#allocation5], 128
    $region29: #{tpu_custom_call.1} parent=1 // pred_fallthru
      _
    %727 = vsyncpa [#allocation4], 1
    %728 = vsyncpa [#allocation5], 1

</llo_original>
